<compile_context>
chip_gen: v5e
topology: v5e:2x2
jax: 0.10.0
libtpu: 0.0.40
codegen_flags: <defaults>
</compile_context>

<pallas_src>
import functools

import jax
import jax.numpy as jnp
from jax.experimental import pallas as pl
from jax.experimental.pallas import tpu as pltpu

_MIB = 1024 * 1024


def _vmem_capacity_bytes() -> int:
    """Best-effort VMEM capacity query; conservative 64-MiB (v7x-sized) fallback."""
    try:
        info = pltpu.get_tpu_info()
        for attr in ("vmem_capacity_bytes", "vmem_size_bytes", "vmem_bytes"):
            cap = getattr(info, attr, None)
            if cap:
                return int(cap)
    except Exception:
        pass
    return 64 * _MIB


def _round_up(x: int, m: int) -> int:
    return ((x + m - 1) // m) * m


def _kldiv_partial_kernel(logits_ref, y_ref, out_ref, *, inv_t: float,
                          block_rows: int, batch: int, mask_rows: bool):
    """One (TB, C) row block: log-softmax over classes + pointwise KL -> scalar partial."""
    logits = logits_ref[...].astype(jnp.float32)
    y = y_ref[...].astype(jnp.float32)

    # log_softmax over the class (lane) axis of logits * (1/T).
    z = logits * inv_t
    m = jnp.max(z, axis=1, keepdims=True)
    lse = jnp.log(jnp.sum(jnp.exp(z - m), axis=1, keepdims=True)) + m
    log_p = z - lse  # y_hat

    # Fused pointwise KL: y * (log(y) - log_p); log(1)=0 handles y == 0.
    # (Matches torch for probability targets; torch.xlogy would NaN on y < 0.)
    log_y = jnp.log(jnp.where(y > 0, y, 1.0))
    kl = y * (log_y - log_p)

    if mask_rows:
        # Ragged last block (no HBM-side padding): rows past `batch` hold garbage.
        # jnp.where (not multiply) so garbage NaN/Inf cannot leak into the sum.
        row = (pl.program_id(0) * block_rows
               + jax.lax.broadcasted_iota(jnp.int32, (block_rows, 1), 0))
        kl = jnp.where(row < batch, kl, 0.0)

    # Per-block scalar partial (summed + scaled in the wrapper).
    out_ref[0, 0] = jnp.sum(kl)


def kldiv_loss(logits: jax.Array, y: jax.Array, temperature: float,
               *, block_rows: int | None = None) -> jax.Array:
    """Returns loss with shape (1,) in logits.dtype (torch: scalar * T-tensor of shape (1,))."""
    assert logits.ndim == 2 and logits.shape == y.shape
    batch, num_classes = logits.shape

    # NOTE: unlike torch's `y = y.type_as(logits)` we do NOT downcast y in HBM; the
    # kernel reads y in its native dtype and upcasts to f32 in-register. This avoids
    # a full read+write convert pass and is (slightly) more accurate than torch when
    # y is wider than logits.
    itemsize = max(jnp.dtype(logits.dtype).itemsize, jnp.dtype(y.dtype).itemsize)

    vmem_cap = _vmem_capacity_bytes()
    if vmem_cap >= 100 * _MIB:        # v5e / v6e: 128 MiB VMEM per TensorCore
        per_input_target = 4 * _MIB   # 2 inputs x 2 bufs x 4 MiB + f32 temps << 96 MiB
        vmem_limit = 96 * _MIB
        two_cores = False
    else:                             # v7x: 64 MiB VMEM per TensorCore, 2 TCs/chip
        per_input_target = 2 * _MIB
        vmem_limit = 48 * _MIB
        two_cores = True

    if block_rows is None:
        rows = per_input_target // max(1, num_classes * itemsize)
        rows = max(8, (rows // 8) * 8)
        rows = min(rows, _round_up(batch, 8))
        if two_cores and batch > 8:
            # Keep >= 2 row blocks so the "parallel" grid axis feeds both TensorCores.
            rows = min(rows, max(8, _round_up(pl.cdiv(batch, 2), 8)))
        block_rows = rows
    block_rows = max(8, (block_rows // 8) * 8)

    num_blocks = pl.cdiv(batch, block_rows)
    mask_rows = (batch % block_rows) != 0   # ragged last block -> in-kernel mask

    # NOTE: temperature is baked in as a Python constant -> a new T recompiles the kernel.
    partials = pl.pallas_call(
        functools.partial(
            _kldiv_partial_kernel,
            inv_t=1.0 / float(temperature),
            block_rows=block_rows,
            batch=batch,
            mask_rows=mask_rows,
        ),
        out_shape=jax.ShapeDtypeStruct((num_blocks, 1), jnp.float32),
        grid_spec=pltpu.PrefetchScalarGridSpec(
            num_scalar_prefetch=0,
            grid=(num_blocks,),
            in_specs=[
                pl.BlockSpec((block_rows, num_classes), lambda i: (i, 0)),
                pl.BlockSpec((block_rows, num_classes), lambda i: (i, 0)),
            ],
            out_specs=pl.BlockSpec((1, 1), lambda i: (i, 0),
                                   memory_space=pltpu.MemorySpace.SMEM),
        ),
        compiler_params=pltpu.CompilerParams(
            dimension_semantics=("parallel",),  # independent row blocks; v7x uses both TCs
            vmem_limit_bytes=vmem_limit,
        ),
    )(logits, y)

    # reduction='batchmean' (original batch size) and * T**2, folded into one constant.
    scale = (float(temperature) ** 2) / batch
    loss = jnp.sum(partials) * scale
    return loss.reshape((1,)).astype(logits.dtype)


def kldiv_loss_ref(logits, y, temperature):
    """Pure-JAX reference mimicking the torch module (incl. y.type_as(logits))."""
    t = float(temperature)
    yf = y.astype(logits.dtype).astype(jnp.float32)
    z = logits.astype(jnp.float32) / t
    log_p = jax.nn.log_softmax(z, axis=1)
    xlogy = jnp.where(yf > 0, yf * jnp.log(jnp.where(yf > 0, yf, 1.0)), 0.0)
    kl = xlogy - yf * log_p
    return (jnp.sum(kl) / logits.shape[0] * t * t).reshape((1,)).astype(logits.dtype)


if __name__ == "__main__":
    TEMPERATURE = 4.0  # deterministic "parameter" from the module's __init__

    key = jax.random.PRNGKey(0)
    k1, k2, k3, k4 = jax.random.split(key, 4)

    # Case 1: small f32 logits (batch=8, classes=128) — single-block grid, no masking.
    B, C = 8, 128
    logits = jax.random.normal(k1, (B, C), dtype=jnp.float32)
    y = jax.nn.softmax(jax.random.normal(k2, (B, C), dtype=jnp.float32), axis=1)

    loss = kldiv_loss(logits, y, TEMPERATURE)
    jax.block_until_ready(loss)
    ref = kldiv_loss_ref(logits, y, TEMPERATURE)
    assert jnp.allclose(loss, ref, rtol=1e-5, atol=1e-5), (loss, ref)

    # Case 2: mixed dtypes (bf16 logits, f32 targets), multi-block grid with a ragged
    # last block (40 rows, 16-row blocks -> blocks of 16/16/8-valid, mask exercised).
    B2, C2 = 40, 256
    logits2 = jax.random.normal(k3, (B2, C2), dtype=jnp.bfloat16)
    y2 = jax.nn.softmax(jax.random.normal(k4, (B2, C2), dtype=jnp.float32), axis=1)

    loss2 = kldiv_loss(logits2, y2, TEMPERATURE, block_rows=16)
    jax.block_until_ready(loss2)
    ref2 = kldiv_loss_ref(logits2, y2, TEMPERATURE)
    assert jnp.allclose(loss2.astype(jnp.float32), ref2.astype(jnp.float32),
                        rtol=2e-2, atol=2e-2), (loss2, ref2)

    print("KERNEL_OK")
</pallas_src>

<mosaic_0001>
module attributes {stable_mosaic.version = 11 : i64} {
  func.func @_kldiv_partial_kernel(%arg0: i32, %arg1: memref<8x128xf32, #tpu.memory_space<vmem>>, %arg2: memref<8x128xf32, #tpu.memory_space<vmem>>, %arg3: memref<1x1xf32, #tpu.memory_space<smem>>) attributes {dimension_semantics = [#tpu.dimension_semantics<parallel>], iteration_bounds = array<i64: 1>, scalar_prefetch = 0 : i64, scratch_operands = 0 : i64, tpu.core_type = #tpu.core_type<tc>, window_params = [{transform_indices = @transform_0, window_bounds = array<i64: 8, 128>}, {transform_indices = @transform_1, window_bounds = array<i64: 8, 128>}, {transform_indices = @transform_2, window_bounds = array<i64: 1, 1>}]} {
    %c0 = arith.constant 0 : index
    %c0_0 = arith.constant 0 : index
    %0 = vector.load %arg1[%c0, %c0_0] : memref<8x128xf32, #tpu.memory_space<vmem>>, vector<8x128xf32>
    %c0_1 = arith.constant 0 : index
    %c0_2 = arith.constant 0 : index
    %1 = vector.load %arg2[%c0_1, %c0_2] : memref<8x128xf32, #tpu.memory_space<vmem>>, vector<8x128xf32>
    %cst = arith.constant 2.500000e-01 : f32
    %2 = vector.broadcast %cst : f32 to vector<8x128xf32>
    %3 = arith.mulf %0, %2 : vector<8x128xf32>
    %cst_3 = arith.constant dense<0xFF800000> : vector<8xf32>
    %4 = vector.multi_reduction <maximumf>, %3, %cst_3 [1] : vector<8x128xf32> to vector<8xf32>
    %5 = vector.shape_cast %4 : vector<8xf32> to vector<8x1xf32>
    %6 = vector.broadcast %5 : vector<8x1xf32> to vector<8x128xf32>
    %7 = arith.subf %3, %6 : vector<8x128xf32>
    %8 = math.exp %7 : vector<8x128xf32>
    %cst_4 = arith.constant dense<0.000000e+00> : vector<8xf32>
    %9 = vector.multi_reduction <add>, %8, %cst_4 [1] : vector<8x128xf32> to vector<8xf32>
    %10 = vector.shape_cast %9 : vector<8xf32> to vector<8x1xf32>
    %11 = math.log %10 : vector<8x1xf32>
    %12 = arith.addf %11, %5 : vector<8x1xf32>
    %13 = vector.broadcast %12 : vector<8x1xf32> to vector<8x128xf32>
    %14 = arith.subf %3, %13 : vector<8x128xf32>
    %cst_5 = arith.constant 0.000000e+00 : f32
    %15 = vector.broadcast %cst_5 : f32 to vector<8x128xf32>
    %16 = arith.cmpf ogt, %1, %15 : vector<8x128xf32>
    %cst_6 = arith.constant 1.000000e+00 : f32
    %17 = vector.broadcast %cst_6 : f32 to vector<8x128xf32>
    %18 = arith.select %16, %1, %17 : vector<8x128xi1>, vector<8x128xf32>
    %19 = math.log %18 : vector<8x128xf32>
    %20 = arith.subf %19, %14 : vector<8x128xf32>
    %21 = arith.mulf %1, %20 : vector<8x128xf32>
    %22 = vector.shape_cast %21 : vector<8x128xf32> to vector<1x8x128xf32>
    %cst_7 = arith.constant dense<0.000000e+00> : vector<1xf32>
    %23 = vector.multi_reduction <add>, %22, %cst_7 [1, 2] : vector<1x8x128xf32> to vector<1xf32>
    %24 = vector.shape_cast %23 : vector<1xf32> to vector<1x1x1xf32>
    %25 = vector.extract %24[0, 0, 0] : f32 from vector<1x1x1xf32>
    %c0_8 = arith.constant 0 : index
    %c0_9 = arith.constant 0 : index
    %26 = memref.load %arg3[%c0_8, %c0_9] : memref<1x1xf32, #tpu.memory_space<smem>>
    memref.store %25, %arg3[%c0_8, %c0_9] : memref<1x1xf32, #tpu.memory_space<smem>>
    return
  }
  func.func @transform_0(%arg0: i32) -> (i32, i32) {
    %c0_i32 = arith.constant 0 : i32
    %c0_i32_0 = arith.constant 0 : i32
    return %arg0, %c0_i32 : i32, i32
  }
  func.func @transform_1(%arg0: i32) -> (i32, i32) {
    %c0_i32 = arith.constant 0 : i32
    %c0_i32_0 = arith.constant 0 : i32
    return %arg0, %c0_i32 : i32, i32
  }
  func.func @transform_2(%arg0: i32) -> (i32, i32) {
    %c0_i32 = arith.constant 0 : i32
    %c0_i32_0 = arith.constant 0 : i32
    return %arg0, %c0_i32 : i32, i32
  }
}

</mosaic_0001>

<llo_original>
// kernel: tpu_custom_call.1
$region0: #{tpu_custom_call.1}
  #allocation0 [shape = 'u32[]', space=smem, size = 0x4, offset = 0x4, fixed_abs, tag = 'smem constant byte address 0x4 - core index']
  #allocation1 [shape = 'u32[72,128]{1,0:T(1,128)}', space=vmem, size = 0x9000, scoped, tag = 'internal scratch']
  %s0 = inlined_call_operand.hbm [shape: f32[8,128], index: 0, kind: input, shape index: {}]
  %s1 = inlined_call_operand.hbm [shape: f32[8,128], index: 1, kind: input, shape index: {}]
  %s2 = inlined_call_operand.hbm [shape: f32[1,1], index: 2, kind: output, shape index: {}]
  %s3 = sld [smem:[#allocation0]]
  $region26: #{tpu_custom_call.1} parent=0
    _
  %s5 = ssub.s32 1, %s3
  %s6 = scalar_select 0, %s5, %s3
  $region1: #{tpu_custom_call.1} parent=0
    #allocation2 [shape = 'u8[4096]{0}', space=vmem, size = 0x1000, scoped, tag = 'input window, operand 0, single buffered']
    #allocation3 [shape = 's32[1]{0}', space=sflag, size = 0x4, scoped, tag = 'scoped memory for tpu_custom_call.1']
    #allocation4 [shape = 's32[1]{0}', space=sflag, size = 0x4, scoped, tag = 'scoped memory for tpu_custom_call.1']
    #allocation5 [shape = 'u8[4096]{0}', space=vmem, size = 0x1000, scoped, tag = 'input window, operand 1, single buffered']
    #allocation6 [shape = 's32[1]{0}', space=sflag, size = 0x4, scoped, tag = 'scoped memory for tpu_custom_call.1']
    #allocation7 [shape = 'u8[512]{0}', space=smem, size = 0x200, scoped, tag = 'output window, operand 0, single buffered']
    %7 = vsyncpa [#allocation3], 0
    %8 = vsyncpa [#allocation6], 0
    %9 = vsyncpa [#allocation4], 0
    // Predicated region
    $region2: #{tpu_custom_call.1} parent=1 // pred_check
      _
    $region3: #{tpu_custom_call.1} parent=1 // pred_check_branch
      %11 = sbr.rel (0) target = $region5
    $region4: #{tpu_custom_call.1} parent=1 // pred_region
      %13 = vsyncadd [#allocation3], 0
      %s15 = sshll.u32 %s0, 4
      %s16 = int_to_ptr.hbm [resolvable:$true] %s15
      %s17 = sshll.u32 [#allocation2], 4
      %s18 = int_to_ptr.vmem [resolvable:$true] %s17
      %20 = dma.hbm_to_vmem [thread:$0]  %s16, 128, %s18, [#allocation3]
    $region5: #{tpu_custom_call.1} parent=1 // pred_fallthru
      _
    // Predicated region
    $region6: #{tpu_custom_call.1} parent=1 // pred_check
      _
    $region7: #{tpu_custom_call.1} parent=1 // pred_check_branch
      %22 = sbr.rel (0) target = $region9
    $region8: #{tpu_custom_call.1} parent=1 // pred_region
      %24 = vsyncadd [#allocation6], 0
      %s26 = sshll.u32 %s1, 4
      %s27 = int_to_ptr.hbm [resolvable:$true] %s26
      %s28 = sshll.u32 [#allocation5], 4
      %s29 = int_to_ptr.vmem [resolvable:$true] %s28
      %31 = dma.hbm_to_vmem [thread:$0]  %s27, 128, %s29, [#allocation6]
    $region9: #{tpu_custom_call.1} parent=1 // pred_fallthru
      _
    // Predicated region
    $region10: #{tpu_custom_call.1} parent=1 // pred_check
      _
    $region11: #{tpu_custom_call.1} parent=1 // pred_check_branch
      %33 = sbr.rel (0) target = $region13
    $region12: #{tpu_custom_call.1} parent=1 // pred_region
      %35 = dma.done [#allocation3], 128
    $region13: #{tpu_custom_call.1} parent=1 // pred_fallthru
      _
    // Predicated region
    $region14: #{tpu_custom_call.1} parent=1 // pred_check
      _
    $region15: #{tpu_custom_call.1} parent=1 // pred_check_branch
      %37 = sbr.rel (0) target = $region17
    $region16: #{tpu_custom_call.1} parent=1 // pred_region
      %39 = dma.done [#allocation6], 128
    $region17: #{tpu_custom_call.1} parent=1 // pred_fallthru
      _
    %v40 = vld [vmem:[#allocation2] sm:$0xff]
    %v41 = vld [vmem:[#allocation5] sm:$0xff]
    %v42 = vmul.f32 %v40, 0.25
    %43 = vmax.xlane.f32.xlu0 %v42
    %v44 = vpop.xlane.xlu0 %43
    %v45 = vsub.f32 %v42, %v44
    %v46 = vmul.f32 %v45, 1.442695
    %v47 = vpow.pop %v46
    %48 = vadd.xlane.f32.xlu0 %v47
    %v49 = vpop.xlane.xlu0 %48
    %v50 = vlog2.pop %v49
    %v51 = vmul.f32 %v50, 0.6931472
    %v52 = vadd.f32 %v51, %v44
    %v53 = vsub.f32 %v42, %v52
    %vm54 = vcmp.gt.f32.partialorder %v41, 0.0
    %v55 = vsel %vm54, %v41, 1.0
    %v56 = vlog2.pop %v55
    %v57 = vmul.f32 %v56, 0.6931472
    %v58 = vsub.f32 %v57, %v53
    %v59 = vmul.f32 %v41, %v58
    %60 = vadd.xlane.f32.xlu0 %v59
    %v61 = vpop.xlane.xlu0 %60
    %v62 = vrot.slane %v61, 4
    %v63 = vadd.f32 %v61, %v62
    %v64 = vrot.slane %v63, 2
    %v65 = vadd.f32 %v63, %v64
    %v66 = vrot.slane %v65, 1
    %v67 = vadd.f32 %v65, %v66
    %s68 = vtos %v67
    %s69 = scalar_lea.smem [#allocation7], 0
    %70 = sst [smem:[%s69]] %s68
    // Predicated region
    $region18: #{tpu_custom_call.1} parent=1 // pred_check
      _
    $region19: #{tpu_custom_call.1} parent=1 // pred_check_branch
      %72 = sbr.rel (0) target = $region21
    $region20: #{tpu_custom_call.1} parent=1 // pred_region
      %74 = vsyncadd [#allocation4], 0
      %s76 = sshll.u32 %s2, 4
      %s77 = int_to_ptr.hbm [resolvable:$true] %s76
      %79 = dma.smem_to_hbm [#allocation7], 16, %s77, [#allocation4]
    $region21: #{tpu_custom_call.1} parent=1 // pred_fallthru
      _
    // Predicated region
    $region22: #{tpu_custom_call.1} parent=1 // pred_check
      _
    $region23: #{tpu_custom_call.1} parent=1 // pred_check_branch
      %81 = sbr.rel (0) target = $region25
    $region24: #{tpu_custom_call.1} parent=1 // pred_region
      %83 = dma.done [#allocation4], 16
    $region25: #{tpu_custom_call.1} parent=1 // pred_fallthru
      _
    %84 = sfence
    %85 = vsyncpa [#allocation3], 1
    %86 = vsyncpa [#allocation6], 1
    %87 = vsyncpa [#allocation4], 1

</llo_original>
